<compile_context>
chip_gen: v7x
topology: tpu7x:2x2x1
jax: 0.10.0
libtpu: 0.0.40
codegen_flags: <defaults>
</compile_context>

<pallas_src>
import jax
import jax.numpy as jnp
from jax.experimental import pallas as pl
from jax.experimental.pallas import tpu as pltpu

EPS = 1e-5          # nn.BatchNorm1d default
NEG_SLOPE = 0.01    # nn.LeakyReLU default


def _vmem_limit_bytes():
    """Generation-aware scoped-VMEM budget (v7x: 64 MiB/TC, v5e/v6e: 128 MiB)."""
    try:
        cap = int(pltpu.get_tpu_info().vmem_capacity_bytes)
    except Exception:
        cap = 64 * 1024 * 1024          # conservative (v7x-sized) fallback
    return max(16 * 1024 * 1024, min((cap * 3) // 4, 100 * 1024 * 1024))


def _pick_batch_tile(n, per_sample_bytes, budget_bytes, cap=16):
    """Largest divisor of n (<= cap) whose per-block footprint fits the budget."""
    tb = 1
    for d in range(1, min(n, cap) + 1):
        if n % d == 0 and d * per_sample_bytes <= budget_bytes:
            tb = d
    return tb


def leaky_relu_bn_conv1d(x, weight, gamma, beta, *, stride, padding):
    """x: (N, C_in, L) f32; weight: (C_out, C_in, K); gamma/beta: (C_out,)."""
    N, C_in, L = x.shape
    C_out, C_in_w, K = weight.shape
    assert C_in_w == C_in
    L_out = (L + 2 * padding - K) // stride + 1
    span = (L_out - 1) * stride + 1

    x = x.astype(jnp.float32)
    # One-time tiny weight repack: (C_out, C_in, K) -> (C_out, K*C_in), tap-major.
    w_flat = jnp.transpose(weight.astype(jnp.float32), (0, 2, 1)).reshape(C_out, K * C_in)
    g2 = gamma.astype(jnp.float32).reshape(C_out, 1)
    b2 = beta.astype(jnp.float32).reshape(C_out, 1)

    # ---- tile sizing (generation-aware) ------------------------------------
    vmem_limit = _vmem_limit_bytes()
    per_sample = 4 * (C_in * (L + 2 * padding) + K * C_in * L_out + 2 * C_out * L_out)
    TB = _pick_batch_tile(N, per_sample, budget_bytes=vmem_limit // 8)
    T = N // TB                                   # number of batch tiles
    NC = 2 if (T >= 2 and T % 2 == 0) else 1      # phase-1 core split (v7x megacore)
    Tc = T // NC
    inv_cnt = 1.0 / float(N * L_out)

    # ---- shared conv block: TB samples -> one (C_out, TB*L_out) matmul ----
    def conv_block(xb, wf):
        # xb: (TB, C_in, L) value; wf: (C_out, K*C_in)
        if padding > 0:
            z = jnp.zeros((TB, C_in, padding), jnp.float32)
            xb = jnp.concatenate([z, xb, z], axis=-1)            # (TB, C_in, L_pad)
        rows = []
        for k in range(K):                                       # K small & static
            if stride == 1:
                tap = xb[:, :, k:k + L_out]                      # (TB, C_in, L_out)
            else:
                # TODO(synk): for stride>1 deployments, a strided Ref load
                # (pl.ds(..., stride=stride)) from a VMEM staging buffer would
                # avoid cross-lane gathers on this value-level strided slice.
                tap = xb[:, :, k:k + span:stride]
            # fold batch onto lanes: (TB, C_in, L_out) -> (C_in, TB*L_out)
            tap = jnp.concatenate([tap[b] for b in range(TB)], axis=-1) if TB > 1 else tap[0]
            rows.append(tap)
        cols = jnp.concatenate(rows, axis=0) if K > 1 else rows[0]    # (K*C_in, TB*L_out)
        return jnp.dot(wf, cols, preferred_element_type=jnp.float32)  # (C_out, TB*L_out)

    # ---- phase 1: conv + per-channel, per-core partial sum / sumsq ---------
    def stats_kernel(x_ref, wf_ref, ps_ref, pssq_ref):
        @pl.when(pl.program_id(1) == 0)          # init this core's partial accumulators
        def _init():
            ps_ref[...] = jnp.zeros_like(ps_ref)
            pssq_ref[...] = jnp.zeros_like(pssq_ref)

        y = conv_block(x_ref[...], wf_ref[...])
        ps_ref[0] += jnp.sum(y, axis=1, keepdims=True)
        pssq_ref[0] += jnp.sum(y * y, axis=1, keepdims=True)

    # ---- phase 2: conv recompute + in-kernel BN fold + LeakyReLU -----------
    def apply_kernel(x_ref, wf_ref, ps_ref, pssq_ref, g_ref, b_ref, o_ref):
        y = conv_block(x_ref[...], wf_ref[...])              # (C_out, TB*L_out)
        s = jnp.sum(ps_ref[...], axis=0)                     # (C_out, 1)
        ssq = jnp.sum(pssq_ref[...], axis=0)
        mean = s * inv_cnt
        var = jnp.maximum(ssq * inv_cnt - mean * mean, 0.0)  # clamp: never negative
        scale = g_ref[...] * jax.lax.rsqrt(var + EPS)
        shift = b_ref[...] - mean * scale
        z = y * scale + shift                                # single per-elem FMA
        z = jnp.where(z >= 0, z, NEG_SLOPE * z)
        for b in range(TB):                                  # unfold lanes back to NCL
            o_ref[b] = z[:, b * L_out:(b + 1) * L_out].astype(o_ref.dtype)

    # ---- pallas_call plumbing ----------------------------------------------
    wf_spec = pl.BlockSpec((C_out, K * C_in), lambda t: (0, 0))
    vec_spec = pl.BlockSpec((C_out, 1), lambda t: (0, 0))
    part_spec = pl.BlockSpec((NC, C_out, 1), lambda t: (0, 0, 0))

    ps, pssq = pl.pallas_call(
        stats_kernel,
        out_shape=(jax.ShapeDtypeStruct((NC, C_out, 1), jnp.float32),
                   jax.ShapeDtypeStruct((NC, C_out, 1), jnp.float32)),
        grid=(NC, Tc),
        in_specs=[pl.BlockSpec((TB, C_in, L), lambda c, t: (c * Tc + t, 0, 0)),
                  pl.BlockSpec((C_out, K * C_in), lambda c, t: (0, 0))],
        out_specs=(pl.BlockSpec((1, C_out, 1), lambda c, t: (c, 0, 0)),
                   pl.BlockSpec((1, C_out, 1), lambda c, t: (c, 0, 0))),
        compiler_params=pltpu.CompilerParams(
            dimension_semantics=("parallel", "arbitrary"),   # per-core partial reductions
            vmem_limit_bytes=vmem_limit),
    )(x, w_flat)

    out = pl.pallas_call(
        apply_kernel,
        out_shape=jax.ShapeDtypeStruct((N, C_out, L_out), jnp.float32),
        grid=(T,),
        in_specs=[pl.BlockSpec((TB, C_in, L), lambda t: (t, 0, 0)),
                  wf_spec, part_spec, part_spec, vec_spec, vec_spec],
        out_specs=pl.BlockSpec((TB, C_out, L_out), lambda t: (t, 0, 0)),
        compiler_params=pltpu.CompilerParams(
            dimension_semantics=("parallel",),               # megacore-shardable epilogue
            vmem_limit_bytes=vmem_limit),
    )(x, w_flat, ps, pssq, g2, b2)

    # TODO(synk): BatchNorm1d running_mean/running_var (momentum) buffer updates are
    # not produced; only the training-mode forward output is computed.
    return out  # (N, C_out, L_out) -- PyTorch NCL layout, no wrapper transpose


def _reference(x, weight, gamma, beta, *, stride, padding):
    """Pure-JAX reference matching PyTorch semantics (sanity check)."""
    y = jax.lax.conv_general_dilated(
        x, weight, window_strides=(stride,), padding=[(padding, padding)],
        dimension_numbers=("NCH", "OIH", "NCH"))
    mean = y.mean(axis=(0, 2), keepdims=True)
    var = ((y - mean) ** 2).mean(axis=(0, 2), keepdims=True)
    y = (y - mean) * jax.lax.rsqrt(var + EPS)
    y = y * gamma[None, :, None] + beta[None, :, None]
    return jnp.where(y >= 0, y, NEG_SLOPE * y)


if __name__ == "__main__":
    # Module hyperparams (small, consistent with Conv1d semantics)
    n_in, n_out, kernel_size, stride, padding = 4, 8, 3, 1, 1
    N, L = 2, 16

    key = jax.random.PRNGKey(0)
    kx, kw = jax.random.split(key)
    x = jax.random.normal(kx, (N, n_in, L), dtype=jnp.float32)

    # gaussian_weights_init: Conv weight ~ N(0, 0.02); BN: gamma=1, beta=0
    weight = 0.02 * jax.random.normal(kw, (n_out, n_in, kernel_size), dtype=jnp.float32)
    gamma = jnp.ones((n_out,), dtype=jnp.float32)
    beta = jnp.zeros((n_out,), dtype=jnp.float32)

    out = leaky_relu_bn_conv1d(x, weight, gamma, beta, stride=stride, padding=padding)
    out = jax.block_until_ready(out)

    ref = _reference(x, weight, gamma, beta, stride=stride, padding=padding)
    L_out = (L + 2 * padding - kernel_size) // stride + 1
    assert out.shape == (N, n_out, L_out)
    assert jnp.allclose(out, ref, atol=1e-4, rtol=1e-4), float(jnp.max(jnp.abs(out - ref)))

    print("KERNEL_OK")
</pallas_src>

<mosaic_0001>
module attributes {stable_mosaic.version = 11 : i64} {
  func.func @stats_kernel(%arg0: i32, %arg1: i32, %arg2: memref<2x4x16xf32, #tpu.memory_space<vmem>>, %arg3: memref<8x12xf32, #tpu.memory_space<vmem>>, %arg4: memref<1x8x1xf32, #tpu.memory_space<vmem>>, %arg5: memref<1x8x1xf32, #tpu.memory_space<vmem>>) attributes {dimension_semantics = [#tpu.dimension_semantics<parallel>, #tpu.dimension_semantics<arbitrary>], iteration_bounds = array<i64: 1, 1>, scalar_prefetch = 0 : i64, scratch_operands = 0 : i64, tpu.core_type = #tpu.core_type<tc>, window_params = [{transform_indices = @transform_0, window_bounds = array<i64: 2, 4, 16>}, {pipeline_mode = #tpu.pipeline_mode<synchronous>, transform_indices = @transform_1, window_bounds = array<i64: 8, 12>}, {transform_indices = @transform_2, window_bounds = array<i64: 1, 8, 1>}, {transform_indices = @transform_3, window_bounds = array<i64: 1, 8, 1>}]} {
    %c0_i32 = arith.constant 0 : i32
    %0 = arith.cmpi eq, %arg1, %c0_i32 : i32
    %1 = arith.extui %0 : i1 to i32
    %c0_i32_0 = arith.constant 0 : i32
    %2 = arith.cmpi ne, %1, %c0_i32_0 : i32
    scf.if %2 {
      %cst_20 = arith.constant 0.000000e+00 : f32
      %44 = vector.broadcast %cst_20 : f32 to vector<1x8x1xf32>
      %c0_21 = arith.constant 0 : index
      %c0_22 = arith.constant 0 : index
      %c0_23 = arith.constant 0 : index
      %45 = vector.load %arg4[%c0_21, %c0_22, %c0_23] : memref<1x8x1xf32, #tpu.memory_space<vmem>>, vector<1x8x1xf32>
      tpu.vector_store %arg4[%c0_21, %c0_22, %c0_23], %44 {strides = array<i32>} : memref<1x8x1xf32, #tpu.memory_space<vmem>>, vector<1x8x1xf32>,
      %cst_24 = arith.constant 0.000000e+00 : f32
      %46 = vector.broadcast %cst_24 : f32 to vector<1x8x1xf32>
      %c0_25 = arith.constant 0 : index
      %c0_26 = arith.constant 0 : index
      %c0_27 = arith.constant 0 : index
      %47 = vector.load %arg5[%c0_25, %c0_26, %c0_27] : memref<1x8x1xf32, #tpu.memory_space<vmem>>, vector<1x8x1xf32>
      tpu.vector_store %arg5[%c0_25, %c0_26, %c0_27], %46 {strides = array<i32>} : memref<1x8x1xf32, #tpu.memory_space<vmem>>, vector<1x8x1xf32>,
    } else {
    }
    %c0 = arith.constant 0 : index
    %c0_1 = arith.constant 0 : index
    %c0_2 = arith.constant 0 : index
    %3 = vector.load %arg2[%c0, %c0_1, %c0_2] : memref<2x4x16xf32, #tpu.memory_space<vmem>>, vector<2x4x16xf32>
    %c0_3 = arith.constant 0 : index
    %c0_4 = arith.constant 0 : index
    %4 = vector.load %arg3[%c0_3, %c0_4] : memref<8x12xf32, #tpu.memory_space<vmem>>, vector<8x12xf32>
    %cst = arith.constant 0.000000e+00 : f32
    %5 = vector.broadcast %cst : f32 to vector<2x4x1xf32>
    %6 = tpu.concatenate %5, %3, %5 in 2 : vector<2x4x1xf32>, vector<2x4x16xf32>, vector<2x4x1xf32> -> vector<2x4x18xf32>
    %7 = vector.extract_strided_slice %6 {offsets = [0, 0, 0], sizes = [2, 4, 16], strides = [1, 1, 1]} : vector<2x4x18xf32> to vector<2x4x16xf32>
    %8 = vector.extract_strided_slice %7 {offsets = [0, 0, 0], sizes = [1, 4, 16], strides = [1, 1, 1]} : vector<2x4x16xf32> to vector<1x4x16xf32>
    %9 = vector.shape_cast %8 : vector<1x4x16xf32> to vector<4x16xf32>
    %10 = vector.extract_strided_slice %7 {offsets = [1, 0, 0], sizes = [1, 4, 16], strides = [1, 1, 1]} : vector<2x4x16xf32> to vector<1x4x16xf32>
    %11 = vector.shape_cast %10 : vector<1x4x16xf32> to vector<4x16xf32>
    %12 = tpu.concatenate %9, %11 in 1 : vector<4x16xf32>, vector<4x16xf32> -> vector<4x32xf32>
    %13 = vector.extract_strided_slice %6 {offsets = [0, 0, 1], sizes = [2, 4, 16], strides = [1, 1, 1]} : vector<2x4x18xf32> to vector<2x4x16xf32>
    %14 = vector.extract_strided_slice %13 {offsets = [0, 0, 0], sizes = [1, 4, 16], strides = [1, 1, 1]} : vector<2x4x16xf32> to vector<1x4x16xf32>
    %15 = vector.shape_cast %14 : vector<1x4x16xf32> to vector<4x16xf32>
    %16 = vector.extract_strided_slice %13 {offsets = [1, 0, 0], sizes = [1, 4, 16], strides = [1, 1, 1]} : vector<2x4x16xf32> to vector<1x4x16xf32>
    %17 = vector.shape_cast %16 : vector<1x4x16xf32> to vector<4x16xf32>
    %18 = tpu.concatenate %15, %17 in 1 : vector<4x16xf32>, vector<4x16xf32> -> vector<4x32xf32>
    %19 = vector.extract_strided_slice %6 {offsets = [0, 0, 2], sizes = [2, 4, 16], strides = [1, 1, 1]} : vector<2x4x18xf32> to vector<2x4x16xf32>
    %20 = vector.extract_strided_slice %19 {offsets = [0, 0, 0], sizes = [1, 4, 16], strides = [1, 1, 1]} : vector<2x4x16xf32> to vector<1x4x16xf32>
    %21 = vector.shape_cast %20 : vector<1x4x16xf32> to vector<4x16xf32>
    %22 = vector.extract_strided_slice %19 {offsets = [1, 0, 0], sizes = [1, 4, 16], strides = [1, 1, 1]} : vector<2x4x16xf32> to vector<1x4x16xf32>
    %23 = vector.shape_cast %22 : vector<1x4x16xf32> to vector<4x16xf32>
    %24 = tpu.concatenate %21, %23 in 1 : vector<4x16xf32>, vector<4x16xf32> -> vector<4x32xf32>
    %25 = tpu.concatenate %12, %18, %24 in 0 : vector<4x32xf32>, vector<4x32xf32>, vector<4x32xf32> -> vector<12x32xf32>
    %cst_5 = arith.constant dense<0.000000e+00> : vector<8x32xf32>
    %26 = tpu.matmul %4, %25, %cst_5 {dimension_numbers = #tpu.dot_dimension_numbers<[1], [0], [0], [1], [0, 0, 1, 1], [], []>} : vector<8x12xf32>, vector<12x32xf32>, vector<8x32xf32> -> vector<8x32xf32>
    %c0_6 = arith.constant 0 : index
    %c0_7 = arith.constant 0 : index
    %c0_8 = arith.constant 0 : index
    %27 = vector.load %arg4[%c0_6, %c0_7, %c0_8] : memref<1x8x1xf32, #tpu.memory_space<vmem>>, vector<1x8x1xf32>
    %28 = vector.shape_cast %27 : vector<1x8x1xf32> to vector<8x1xf32>
    %cst_9 = arith.constant dense<0.000000e+00> : vector<8xf32>
    %29 = vector.multi_reduction <add>, %26, %cst_9 [1] : vector<8x32xf32> to vector<8xf32>
    %30 = vector.shape_cast %29 : vector<8xf32> to vector<8x1xf32>
    %31 = arith.addf %28, %30 : vector<8x1xf32>
    %c0_10 = arith.constant 0 : index
    %c0_11 = arith.constant 0 : index
    %c0_12 = arith.constant 0 : index
    %32 = vector.load %arg4[%c0_10, %c0_11, %c0_12] : memref<1x8x1xf32, #tpu.memory_space<vmem>>, vector<1x8x1xf32>
    %33 = vector.shape_cast %32 : vector<1x8x1xf32> to vector<8x1xf32>
    %34 = vector.shape_cast %31 : vector<8x1xf32> to vector<1x8x1xf32>
    tpu.vector_store %arg4[%c0_10, %c0_11, %c0_12], %34 {strides = array<i32>} : memref<1x8x1xf32, #tpu.memory_space<vmem>>, vector<1x8x1xf32>,
    %c0_13 = arith.constant 0 : index
    %c0_14 = arith.constant 0 : index
    %c0_15 = arith.constant 0 : index
    %35 = vector.load %arg5[%c0_13, %c0_14, %c0_15] : memref<1x8x1xf32, #tpu.memory_space<vmem>>, vector<1x8x1xf32>
    %36 = vector.shape_cast %35 : vector<1x8x1xf32> to vector<8x1xf32>
    %37 = arith.mulf %26, %26 : vector<8x32xf32>
    %cst_16 = arith.constant dense<0.000000e+00> : vector<8xf32>
    %38 = vector.multi_reduction <add>, %37, %cst_16 [1] : vector<8x32xf32> to vector<8xf32>
    %39 = vector.shape_cast %38 : vector<8xf32> to vector<8x1xf32>
    %40 = arith.addf %36, %39 : vector<8x1xf32>
    %c0_17 = arith.constant 0 : index
    %c0_18 = arith.constant 0 : index
    %c0_19 = arith.constant 0 : index
    %41 = vector.load %arg5[%c0_17, %c0_18, %c0_19] : memref<1x8x1xf32, #tpu.memory_space<vmem>>, vector<1x8x1xf32>
    %42 = vector.shape_cast %41 : vector<1x8x1xf32> to vector<8x1xf32>
    %43 = vector.shape_cast %40 : vector<8x1xf32> to vector<1x8x1xf32>
    tpu.vector_store %arg5[%c0_17, %c0_18, %c0_19], %43 {strides = array<i32>} : memref<1x8x1xf32, #tpu.memory_space<vmem>>, vector<1x8x1xf32>,
    return
  }
  func.func @transform_0(%arg0: i32, %arg1: i32) -> (i32, i32, i32) {
    %c1_i32 = arith.constant 1 : i32
    %0 = arith.muli %arg0, %c1_i32 : i32
    %1 = arith.addi %0, %arg1 : i32
    %c0_i32 = arith.constant 0 : i32
    %c0_i32_0 = arith.constant 0 : i32
    %c0_i32_1 = arith.constant 0 : i32
    return %1, %c0_i32, %c0_i32_0 : i32, i32, i32
  }
  func.func @transform_1(%arg0: i32, %arg1: i32) -> (i32, i32) {
    %c0_i32 = arith.constant 0 : i32
    %c0_i32_0 = arith.constant 0 : i32
    %c0_i32_1 = arith.constant 0 : i32
    return %c0_i32, %c0_i32_0 : i32, i32
  }
  func.func @transform_2(%arg0: i32, %arg1: i32) -> (i32, i32, i32) {
    %c0_i32 = arith.constant 0 : i32
    %c0_i32_0 = arith.constant 0 : i32
    %c0_i32_1 = arith.constant 0 : i32
    return %arg0, %c0_i32, %c0_i32_0 : i32, i32, i32
  }
  func.func @transform_3(%arg0: i32, %arg1: i32) -> (i32, i32, i32) {
    %c0_i32 = arith.constant 0 : i32
    %c0_i32_0 = arith.constant 0 : i32
    %c0_i32_1 = arith.constant 0 : i32
    return %arg0, %c0_i32, %c0_i32_0 : i32, i32, i32
  }
}

</mosaic_0001>

<llo_original>
// kernel: tpu_custom_call.1
$region0: #{tpu_custom_call.1}
  #allocation0 [shape = 'u32[]', space=smem, size = 0x4, offset = 0x4, fixed_abs, tag = 'smem constant byte address 0x4 - core index']
  #allocation1 [shape = 'u32[144,128]{1,0:T(1,128)}', space=vmem, size = 0x12000, scoped, tag = 'internal scratch']
  %s0 = inlined_call_operand.hbm [shape: f32[2,4,16], index: 0, kind: input, shape index: {}]
  %s1 = inlined_call_operand.hbm [shape: f32[8,12], index: 1, kind: input, shape index: {}]
  %s2 = inlined_call_operand.vmem [shape: f32[1,8,1], index: 2, kind: output, shape index: {0}]
  %s3 = inlined_call_operand.vmem [shape: f32[1,8,1], index: 3, kind: output, shape index: {1}]
  %4 = xla_tuple %s2, %s3
  %s5 = sld [smem:[#allocation0]]
  $region38: #{tpu_custom_call.1} parent=0
    _
  %s7 = ssub.s32 1, %s5
  %s8 = scalar_select 0, %s7, %s5
  $region1: #{tpu_custom_call.1} parent=0
    #allocation2 [shape = 'u8[4096]{0}', space=vmem, size = 0x1000, scoped, tag = 'input window, operand 0, single buffered']
    #allocation3 [shape = 's32[1]{0}', space=sflag, size = 0x4, scoped, tag = 'scoped memory for tpu_custom_call.1']
    #allocation4 [shape = 'u8[4096]{0}', space=vmem, size = 0x1000, scoped, tag = 'input window, operand 1, single buffered']
    #allocation5 [shape = 's32[1]{0}', space=sflag, size = 0x4, scoped, tag = 'scoped memory for tpu_custom_call.1']
    %9 = vsyncpa [#allocation3], 0
    %10 = vsyncpa [#allocation5], 0
    // Predicated region
    $region2: #{tpu_custom_call.1} parent=1 // pred_check
      _
    $region3: #{tpu_custom_call.1} parent=1 // pred_check_branch
      %12 = sbr.rel (0) target = $region5
    $region4: #{tpu_custom_call.1} parent=1 // pred_region
      %s13 = sadd.s32 0, 0
      %s14 = smul.u32 2, %s13
      %s16 = ssub.s32 128, 128
      %17 = vsyncadd [#allocation3], %s16
      %s18 = smul.addr %s14, 64
      %s19 = scalar_lea.hbm %s0, %s18
      %s20 = sshll.u32 [#allocation2], 4
      %s21 = int_to_ptr.vmem [resolvable:$true] %s20
      %26 = dma.hbm_to_vmem [thread:$0]  %s19, 128, %s21, [#allocation3], 64, 64, 4
    $region5: #{tpu_custom_call.1} parent=1 // pred_fallthru
      _
    // Predicated region
    $region6: #{tpu_custom_call.1} parent=1 // pred_check
      _
    $region7: #{tpu_custom_call.1} parent=1 // pred_check_branch
      %28 = sbr.rel (0) target = $region9
    $region8: #{tpu_custom_call.1} parent=1 // pred_region
      %s30 = ssub.s32 128, 128
      %31 = vsyncadd [#allocation5], %s30
      %s33 = sshll.u32 [#allocation4], 4
      %s34 = int_to_ptr.vmem [resolvable:$true] %s33
      %36 = dma.hbm_to_vmem [thread:$0]  %s1, 128, %s34, [#allocation5]
    $region9: #{tpu_custom_call.1} parent=1 // pred_fallthru
      _
    // Predicated region
    $region10: #{tpu_custom_call.1} parent=1 // pred_check
      _
    $region11: #{tpu_custom_call.1} parent=1 // pred_check_branch
      %38 = sbr.rel (0) target = $region13
    $region12: #{tpu_custom_call.1} parent=1 // pred_region
      %39 = dma.done [#allocation3], 128
    $region13: #{tpu_custom_call.1} parent=1 // pred_fallthru
      _
    // Predicated region
    $region14: #{tpu_custom_call.1} parent=1 // pred_check
      _
    $region15: #{tpu_custom_call.1} parent=1 // pred_check_branch
      %41 = sbr.rel (0) target = $region17
    $region16: #{tpu_custom_call.1} parent=1 // pred_region
      %42 = dma.done [#allocation5], 128
    $region17: #{tpu_custom_call.1} parent=1 // pred_fallthru
      _
    %s43 = sadd.s32 0, 0
    %s44 = smul.u32 2, %s43
    %p45 = scmp.eq.s32.totalorder 0, 0
    // Predicated region
    $region18: #{tpu_custom_call.1} parent=1 // pred_check
      %p46 = pneg %p45
    $region19: #{tpu_custom_call.1} parent=1 // pred_check_branch
      %48 = sbr.rel (%p46) target = $region21
    $region20: #{tpu_custom_call.1} parent=1 // pred_region
      %vm49 = vcmask 7168
      %50 = vst.msk [vmem:[%s2] sm:$0xff] %vm49, 0.0
      %51 = vst.msk [vmem:[%s3] sm:$0xff] %vm49, 0.0
    $region21: #{tpu_custom_call.1} parent=1 // pred_fallthru
      _
    %v52 = vld [vmem:[#allocation2] sm:$0xf]
    %v53 = vld [vmem:[#allocation2 + $0x4] sm:$0xf]
    %v54 = vld [vmem:[#allocation4] sm:$0xff]
    %57 = vrot.lane.b32.xlu0 %v52, 1
    %v58 = vpop.permute.xlu0 %57
    %59 = vrot.lane.b32.xlu0 %v53, 1
    %v60 = vpop.permute.xlu0 %59
    %vm63 = vcmask 7168
    %v64 = vsel %vm63, 0.0, %v58
    %v65 = vsel %vm63, 0.0, %v60
    %vm66 = vcmask 138240
    %v67 = vsel %vm66, %v64, 0.0
    %v68 = vsel %vm66, %v65, 0.0
    %70 = vrot.lane.b32.xlu0 %v68, 16
    %v71 = vpop.permute.xlu0 %70
    %vm73 = vcmask 130048
    %v74 = vsel %vm73, %v67, %v71
    %76 = vrot.lane.b32.xlu0 %v67, 127
    %v77 = vpop.permute.xlu0 %76
    %79 = vrot.lane.b32.xlu0 %v68, 15
    %v80 = vpop.permute.xlu0 %79
    %v82 = vsel %vm73, %v77, %v80
    %83 = vrot.lane.b32.xlu0 %v67, 126
    %v84 = vpop.permute.xlu0 %83
    %86 = vrot.lane.b32.xlu0 %v68, 14
    %v87 = vpop.permute.xlu0 %86
    %v89 = vsel %vm73, %v84, %v87
    %v91 = vrot.slane %v82, 4
    %vm93 = vcmask 1043456
    %v94 = vsel %vm93, %v74, %v91
    %vm95 = vcmask 97280
    %v97 = vsel %vm95, %v54, 0
    %v100 = vsel %vm93, %v89, 0
    %102 = vmatprep.subr.mxu0 0.0
    %103 = vmatpush1.msra.mxu0 %v94
    %104 = vmatprep.subr.mxu0 0.0
    %105 = vmatpush1.msra.mxu0 %v100
    %106 = vmatprep.subr.mxu0 0.0
    %107 = vmatpush1.msra.mxu0 0.0
    %108 = vmatprep.subr.mxu0 0.0
    %109 = vmatpush1.msra.mxu0 0.0
    %110 = vmatprep.subr.mxu0 0.0
    %111 = vmatpush1.msra.mxu0 0.0
    %112 = vmatprep.subr.mxu0 0.0
    %113 = vmatpush1.msra.mxu0 0.0
    %114 = vmatprep.subr.mxu0 0.0
    %115 = vmatpush1.msra.mxu0 0.0
    %116 = vmatprep.subr.mxu0 0.0
    %117 = vmatpush1.msra.mxu0 0.0
    %118 = vmatprep.subr.mxu0 0.0
    %119 = vmatpush1.msra.mxu0 0.0
    %120 = vmatprep.subr.mxu0 0.0
    %121 = vmatpush1.msra.mxu0 0.0
    %122 = vmatprep.subr.mxu0 0.0
    %123 = vmatpush1.msra.mxu0 0.0
    %124 = vmatprep.subr.mxu0 0.0
    %125 = vmatpush1.msra.mxu0 0.0
    %126 = vmatprep.subr.mxu0 0.0
    %127 = vmatpush1.msra.mxu0 0.0
    %128 = vmatprep.subr.mxu0 0.0
    %129 = vmatpush1.msra.mxu0 0.0
    %130 = vmatprep.subr.mxu0 0.0
    %131 = vmatpush1.msra.mxu0 0.0
    %132 = vmatprep.subr.mxu0 0.0
    %133 = vmatpush1.msra.mxu0 0.0
    %134 = vmatprep.subr.mxu0 0.0
    %135 = vmatpush1.msra.mxu0 0.0
    %136 = vmatprep.subr.mxu0 0.0
    %137 = vmatpush1.msra.mxu0 0.0
    %138 = vmatprep.subr.mxu0 0.0
    %139 = vmatpush1.msra.mxu0 0.0
    %140 = vmatprep.subr.mxu0 0.0
    %141 = vmatpush1.msra.mxu0 0.0
    %142 = vmatprep.subr.mxu0 0.0
    %143 = vmatpush1.msra.mxu0 0.0
    %144 = vmatprep.subr.mxu0 0.0
    %145 = vmatpush1.msra.mxu0 0.0
    %146 = vmatprep.subr.mxu0 0.0
    %147 = vmatpush1.msra.mxu0 0.0
    %148 = vmatprep.subr.mxu0 0.0
    %149 = vmatpush1.msra.mxu0 0.0
    %150 = vmatprep.subr.mxu0 0.0
    %151 = vmatpush1.msra.mxu0 0.0
    %152 = vmatprep.subr.mxu0 0.0
    %153 = vmatpush1.msra.mxu0 0.0
    %154 = vmatprep.subr.mxu0 0.0
    %155 = vmatpush1.msra.mxu0 0.0
    %156 = vmatprep.subr.mxu0 0.0
    %157 = vmatpush1.msra.mxu0 0.0
    %158 = vmatprep.subr.mxu0 0.0
    %159 = vmatpush1.msra.mxu0 0.0
    %160 = vmatprep.subr.mxu0 0.0
    %161 = vmatpush1.msra.mxu0 0.0
    %162 = vmatprep.subr.mxu0 0.0
    %163 = vmatpush1.msra.mxu0 0.0
    %164 = vmatprep.subr.mxu0 0.0
    %165 = vmatpush1.msra.mxu0 0.0
    %166 = vmatprep.mubr.f32.mxu0 0.0
    %167 = vmatmul.mubr.f32.gmra.mrb[0].mxu0 %v97
    %v168 = vpop.f32.mrb[0].mxu0
    %v169 = vadd.f32 0.0, %v168
    %v170 = vpop.f32.mrb[0].mxu0
    %171 = vdwg.mxu0
    %v172 = vld [vmem:[%s2] sm:$0xff]
    %vm173 = vcmask 261120
    %v174 = vsel %vm173, %v169, 0.0
    %175 = vadd.xlane.f32.xlu0 %v174
    %v176 = vpop.xlane.xlu0 %175
    %v177 = vadd.f32 %v172, %v176
    %178 = vst.msk [vmem:[%s2] sm:$0xff] %vm63, %v177
    %v179 = vld [vmem:[%s3] sm:$0xff]
    %v180 = vmul.f32 %v169, %v169
    %v181 = vsel %vm173, %v180, 0.0
    %182 = vadd.xlane.f32.xlu0 %v181
    %v183 = vpop.xlane.xlu0 %182
    %v184 = vadd.f32 %v179, %v183
    %185 = vst.msk [vmem:[%s3] sm:$0xff] %vm63, %v184
    // Predicated region
    $region22: #{tpu_custom_call.1} parent=1 // pred_check
      _
    $region23: #{tpu_custom_call.1} parent=1 // pred_check_branch
      %187 = sbr.rel (0) target = $region25
    $region24: #{tpu_custom_call.1} parent=1 // pred_region
      _
    $region25: #{tpu_custom_call.1} parent=1 // pred_fallthru
      _
    // Predicated region
    $region26: #{tpu_custom_call.1} parent=1 // pred_check
      _
    $region27: #{tpu_custom_call.1} parent=1 // pred_check_branch
      %189 = sbr.rel (0) target = $region29
    $region28: #{tpu_custom_call.1} parent=1 // pred_region
      _
    $region29: #{tpu_custom_call.1} parent=1 // pred_fallthru
      _
    // Predicated region
    $region30: #{tpu_custom_call.1} parent=1 // pred_check
      _
    $region31: #{tpu_custom_call.1} parent=1 // pred_check_branch
      %191 = sbr.rel (0) target = $region33
    $region32: #{tpu_custom_call.1} parent=1 // pred_region
      _
    $region33: #{tpu_custom_call.1} parent=1 // pred_fallthru
      _
    // Predicated region
    $region34: #{tpu_custom_call.1} parent=1 // pred_check
      _
    $region35: #{tpu_custom_call.1} parent=1 // pred_check_branch
      %193 = sbr.rel (0) target = $region37
    $region36: #{tpu_custom_call.1} parent=1 // pred_region
      _
    $region37: #{tpu_custom_call.1} parent=1 // pred_fallthru
      _
    %194 = vsyncpa [#allocation3], 1
    %195 = vsyncpa [#allocation5], 1

</llo_original>
